<compile_context>
chip_gen: v5e
topology: v5e:2x2
jax: 0.10.0
libtpu: 0.0.40
codegen_flags: <defaults>
</compile_context>

<pallas_src>
import functools

import jax
import jax.numpy as jnp
from jax import lax
from jax.experimental import pallas as pl
from jax.experimental.pallas import tpu as pltpu

EPS = 1e-5
THRESH = 0.5  # BatchNorm3d1.reset_parameters -> weight = thresh, bias = 0
_CHUNK = 8    # rows of the leading axis processed per streamed step


# --------------------------------------------------------------------------
# In-kernel helpers (streamed so no full-tile f32 / x*x temporaries are live)
# --------------------------------------------------------------------------
def _streamed_sums(x_ref, chunk):
    """Per-channel sum / sum-of-squares of an (R, tc, HWp) VMEM block.

    Streams the leading axis in `chunk`-row slices; only two (tc, HWp) f32
    accumulators plus one chunk are live at a time.  Returns ((tc,1), (tc,1))
    f32 sums.  (E[x^2]-mean^2 in f32; TODO(synk): Welford / centered second
    pass for data with mean >> std.)
    """
    R, tc, HWp = x_ref.shape
    chunk = min(chunk, R)
    n_full = R // chunk
    rem = R - n_full * chunk

    def add_chunk(start, size, s, ss):
        xc = x_ref[pl.ds(start, size), :, :].astype(jnp.float32)
        return s + jnp.sum(xc, axis=0), ss + jnp.sum(xc * xc, axis=0)

    zeros = jnp.zeros((tc, HWp), jnp.float32)

    def body(i, carry):
        s, ss = carry
        start = pl.multiple_of(i * chunk, chunk)
        return add_chunk(start, chunk, s, ss)

    s, ss = lax.fori_loop(0, n_full, body, (zeros, zeros),
                          unroll=True if n_full <= 8 else 2)
    if rem:
        s, ss = add_chunk(n_full * chunk, rem, s, ss)

    # One cross-lane (XLU) reduce per statistic on the small partials.
    return (jnp.sum(s, axis=-1, keepdims=True),
            jnp.sum(ss, axis=-1, keepdims=True))


def _streamed_normalize(x_ref, o_ref, scale, shift, chunk):
    """o = x * scale + shift (per-channel (tc,1) scale/shift), streamed."""
    R = x_ref.shape[0]
    chunk = min(chunk, R)
    n_full = R // chunk
    rem = R - n_full * chunk

    def write_chunk(start, size):
        xc = x_ref[pl.ds(start, size), :, :].astype(jnp.float32)
        o_ref[pl.ds(start, size), :, :] = (xc * scale + shift).astype(o_ref.dtype)

    def body(i, _):
        start = pl.multiple_of(i * chunk, chunk)
        write_chunk(start, chunk)
        return 0

    lax.fori_loop(0, n_full, body, 0, unroll=True if n_full <= 8 else 2)
    if rem:
        write_chunk(n_full * chunk, rem)


# --------------------------------------------------------------------------
# Kernels
# --------------------------------------------------------------------------
def _bn_fused_kernel(x_ref, w_ref, b_ref, o_ref, *, n_valid, chunk):
    """Single pass: x_ref (B, tc, HWp) holds ALL data for tc channels."""
    s, ss = _streamed_sums(x_ref, chunk)                   # (tc, 1) each
    inv_n = jnp.float32(1.0 / n_valid)
    mean = s * inv_n
    var = jnp.maximum(ss * inv_n - mean * mean, 0.0)       # biased var (PyTorch BN)
    inv = lax.rsqrt(var + EPS)                             # EUP
    scale = inv * w_ref[...]
    shift = b_ref[...] - mean * scale
    # Re-read x_ref from VMEM (3 vld/cycle -> free) for the normalize pass.
    _streamed_normalize(x_ref, o_ref, scale, shift, chunk)


def _bn_stats_kernel(x_ref, w_ref, b_ref, scale_ref, shift_ref,
                     s_acc, ss_acc, *, n_valid, chunk):
    """Two-pass, pass 1: accumulate sum/sumsq across B blocks (inner, 'arbitrary'
    grid axis), emit folded per-channel scale/shift on the last B block."""
    b_idx = pl.program_id(1)

    @pl.when(b_idx == 0)
    def _():
        s_acc[...] = jnp.zeros_like(s_acc)
        ss_acc[...] = jnp.zeros_like(ss_acc)

    s, ss = _streamed_sums(x_ref, chunk)
    s_acc[...] += s
    ss_acc[...] += ss

    @pl.when(b_idx == pl.num_programs(1) - 1)
    def _():
        inv_n = jnp.float32(1.0 / n_valid)
        mean = s_acc[...] * inv_n
        var = jnp.maximum(ss_acc[...] * inv_n - mean * mean, 0.0)
        inv = lax.rsqrt(var + EPS)
        scale = inv * w_ref[...]
        scale_ref[...] = scale
        shift_ref[...] = b_ref[...] - mean * scale


def _bn_apply_kernel(x_ref, scale_ref, shift_ref, o_ref, *, chunk):
    """Two-pass, pass 2: per-channel FMA."""
    _streamed_normalize(x_ref, o_ref, scale_ref[...], shift_ref[...], chunk)


# --------------------------------------------------------------------------
# Planning (generation-aware tile / grid selection)
# --------------------------------------------------------------------------
def _gen_params():
    """(tile_budget_bytes, vmem_limit_bytes, want_even_grid)."""
    vmem = 128 * 2**20
    try:
        info = pltpu.get_tpu_info()
        vmem = getattr(info, "vmem_capacity_bytes", None) or vmem
    except Exception:
        pass
    if vmem <= 64 * 2**20:
        # v7x-class: half the VMEM, 2 TensorCores -> smaller tiles, even grids.
        return 4 * 2**20, 48 * 2**20, True
    # v5e / v6e: 128 MiB physical VMEM -> bigger tiles, explicit higher limit
    # (v5e's scoped default is only 16 MiB, so the explicit limit is mandatory).
    return 12 * 2**20, 64 * 2**20, False


def _channel_tiles(C):
    """Channel tiles that are multiples of 8 AND divide C (or C itself), so the
    sublane constraint holds and no block ever reads out-of-bounds channels."""
    tiles = {C}
    for d in range(8, C, 8):
        if C % d == 0:
            tiles.add(d)
    return sorted(tiles)


def _divisors(n):
    return [d for d in range(1, n + 1) if n % d == 0]


def _plan(B, C, HWp, itemsize, tile_budget, want_even):
    per_channel = B * HWp * itemsize
    tiles = _channel_tiles(C)

    # --- fused single pass: needs all of a channel in one tile AND >= 4 grid
    #     steps so the pipeline double-buffers (and v7x shards over both TCs).
    fused = [tc for tc in tiles
             if tc * per_channel <= tile_budget and C // tc >= 4]
    if fused:
        if want_even:
            even = [tc for tc in fused if (C // tc) % 2 == 0]
            if even:
                fused = even
        return "fused", max(fused), None

    # --- two-pass fallback: tile the batch axis too (works for small C and
    #     for activations where even an 8-channel slab exceeds VMEM).
    tc = tiles[0]
    row_bytes = max(tc * HWp * itemsize, 1)
    bt_cap = max(1, min(B, tile_budget // row_bytes))
    divs = [d for d in _divisors(B) if d <= bt_cap] or [1]
    prefer = [d for d in divs if (B // d) >= 4]
    if want_even and prefer:
        even = [d for d in prefer if (B // d) % 2 == 0]
        if even:
            prefer = even
    bt = max(prefer) if prefer else max(divs)
    return "two_pass", tc, bt


# --------------------------------------------------------------------------
# Wrapper
# --------------------------------------------------------------------------
def batch_norm_2d_forward(x, weight, bias):
    """x: (T, N, C, H, W); weight/bias: (C,).  Training-mode BN over dim 2.
    TODO(synk): running_mean/running_var updates (training side effects) are
    not reproduced; only the forward output is."""
    T, N, C, H, W = x.shape
    B, HW = T * N, H * W
    itemsize = x.dtype.itemsize

    # Free reshape; lane-density guard (pad merged spatial dim to 128).
    x3 = x.reshape(B, C, HW)
    HWp = ((HW + 127) // 128) * 128
    if HWp != HW:
        # TODO(synk): in-kernel lane masking would avoid this extra HBM copy.
        x3 = jnp.pad(x3, ((0, 0), (0, 0), (0, HWp - HW)))

    w2 = weight.reshape(C, 1).astype(jnp.float32)
    b2 = bias.reshape(C, 1).astype(jnp.float32)
    n_valid = B * HW  # zero padding does not perturb the sums

    tile_budget, vmem_limit, want_even = _gen_params()
    mode, tc, bt = _plan(B, C, HWp, itemsize, tile_budget, want_even)
    grid_c = C // tc

    if mode == "fused":
        cost = pl.CostEstimate(flops=5 * B * C * HWp, transcendentals=C,
                               bytes_accessed=2 * B * C * HWp * itemsize + 8 * C)
        y3 = pl.pallas_call(
            functools.partial(_bn_fused_kernel, n_valid=n_valid, chunk=_CHUNK),
            out_shape=jax.ShapeDtypeStruct((B, C, HWp), x.dtype),
            grid=(grid_c,),
            in_specs=[
                pl.BlockSpec((B, tc, HWp), lambda i: (0, i, 0)),
                pl.BlockSpec((tc, 1), lambda i: (i, 0)),
                pl.BlockSpec((tc, 1), lambda i: (i, 0)),
            ],
            out_specs=pl.BlockSpec((B, tc, HWp), lambda i: (0, i, 0)),
            compiler_params=pltpu.CompilerParams(
                dimension_semantics=("parallel",),
                vmem_limit_bytes=vmem_limit,
            ),
            cost_estimate=cost,
        )(x3, w2, b2)
    else:
        grid_b = B // bt

        # Pass 1: per-channel stats -> folded (scale, shift).
        stats_cost = pl.CostEstimate(flops=3 * B * C * HWp, transcendentals=C,
                                     bytes_accessed=B * C * HWp * itemsize + 8 * C)
        scale, shift = pl.pallas_call(
            functools.partial(_bn_stats_kernel, n_valid=n_valid, chunk=_CHUNK),
            out_shape=(jax.ShapeDtypeStruct((C, 1), jnp.float32),
                       jax.ShapeDtypeStruct((C, 1), jnp.float32)),
            grid=(grid_c, grid_b),
            in_specs=[
                pl.BlockSpec((bt, tc, HWp), lambda c, b: (b, c, 0)),
                pl.BlockSpec((tc, 1), lambda c, b: (c, 0)),
                pl.BlockSpec((tc, 1), lambda c, b: (c, 0)),
            ],
            out_specs=(pl.BlockSpec((tc, 1), lambda c, b: (c, 0)),
                       pl.BlockSpec((tc, 1), lambda c, b: (c, 0))),
            scratch_shapes=[pltpu.VMEM((tc, 1), jnp.float32),
                            pltpu.VMEM((tc, 1), jnp.float32)],
            compiler_params=pltpu.CompilerParams(
                dimension_semantics=("parallel", "arbitrary"),
                vmem_limit_bytes=vmem_limit,
            ),
            cost_estimate=stats_cost,
        )(x3, w2, b2)

        # Pass 2: normalize (fully parallel grid).
        apply_cost = pl.CostEstimate(flops=2 * B * C * HWp, transcendentals=0,
                                     bytes_accessed=2 * B * C * HWp * itemsize + 8 * C)
        y3 = pl.pallas_call(
            functools.partial(_bn_apply_kernel, chunk=_CHUNK),
            out_shape=jax.ShapeDtypeStruct((B, C, HWp), x.dtype),
            grid=(grid_c, grid_b),
            in_specs=[
                pl.BlockSpec((bt, tc, HWp), lambda c, b: (b, c, 0)),
                pl.BlockSpec((tc, 1), lambda c, b: (c, 0)),
                pl.BlockSpec((tc, 1), lambda c, b: (c, 0)),
            ],
            out_specs=pl.BlockSpec((bt, tc, HWp), lambda c, b: (b, c, 0)),
            compiler_params=pltpu.CompilerParams(
                dimension_semantics=("parallel", "parallel"),
                vmem_limit_bytes=vmem_limit,
            ),
            cost_estimate=apply_cost,
        )(x3, scale, shift)

    if HWp != HW:
        y3 = y3[:, :, :HW]
    return y3.reshape(T, N, C, H, W)


if __name__ == "__main__":
    key = jax.random.PRNGKey(0)
    T, N, C, H, W = 4, 2, 4, 16, 16
    x = jax.random.normal(key, (T, N, C, H, W), dtype=jnp.float32)

    # Deterministic parameter init, exactly as BatchNorm3d1.reset_parameters.
    weight = jnp.full((C,), THRESH, dtype=jnp.float32)
    bias = jnp.zeros((C,), dtype=jnp.float32)

    y = jax.block_until_ready(batch_norm_2d_forward(x, weight, bias))

    # Pure-JAX reference of the same forward (training-mode BN over (T,N,H,W)).
    mean = x.mean(axis=(0, 1, 3, 4), keepdims=True)
    var = ((x - mean) ** 2).mean(axis=(0, 1, 3, 4), keepdims=True)
    ref = (x - mean) / jnp.sqrt(var + EPS) * weight.reshape(1, 1, C, 1, 1) \
          + bias.reshape(1, 1, C, 1, 1)
    assert y.shape == x.shape and y.dtype == x.dtype
    assert jnp.allclose(y, ref, atol=1e-4, rtol=1e-4)

    print("KERNEL_OK")
</pallas_src>

<mosaic_0001>
module attributes {stable_mosaic.version = 11 : i64} {
  func.func @_bn_stats_kernel(%arg0: i32, %arg1: i32, %arg2: memref<2x4x256xf32, #tpu.memory_space<vmem>>, %arg3: memref<4x1xf32, #tpu.memory_space<vmem>>, %arg4: memref<4x1xf32, #tpu.memory_space<vmem>>, %arg5: memref<4x1xf32, #tpu.memory_space<vmem>>, %arg6: memref<4x1xf32, #tpu.memory_space<vmem>>, %arg7: memref<4x1xf32, #tpu.memory_space<vmem>>, %arg8: memref<4x1xf32, #tpu.memory_space<vmem>>) attributes {dimension_semantics = [#tpu.dimension_semantics<parallel>, #tpu.dimension_semantics<arbitrary>], iteration_bounds = array<i64: 1, 4>, scalar_prefetch = 0 : i64, scratch_operands = 2 : i64, tpu.core_type = #tpu.core_type<tc>, window_params = [{transform_indices = @transform_0, window_bounds = array<i64: 2, 4, 256>}, {transform_indices = @transform_1, window_bounds = array<i64: 4, 1>}, {transform_indices = @transform_2, window_bounds = array<i64: 4, 1>}, {transform_indices = @transform_3, window_bounds = array<i64: 4, 1>}, {transform_indices = @transform_4, window_bounds = array<i64: 4, 1>}]} {
    %c0_i32 = arith.constant 0 : i32
    %0 = arith.cmpi eq, %arg1, %c0_i32 : i32
    %1 = arith.extui %0 : i1 to i32
    %c0_i32_0 = arith.constant 0 : i32
    %2 = arith.cmpi ne, %1, %c0_i32_0 : i32
    scf.if %2 {
      %cst_16 = arith.constant 0.000000e+00 : f32
      %26 = vector.broadcast %cst_16 : f32 to vector<4x1xf32>
      %c0_17 = arith.constant 0 : index
      %c0_18 = arith.constant 0 : index
      %27 = vector.load %arg7[%c0_17, %c0_18] : memref<4x1xf32, #tpu.memory_space<vmem>>, vector<4x1xf32>
      tpu.vector_store %arg7[%c0_17, %c0_18], %26 {strides = array<i32>} : memref<4x1xf32, #tpu.memory_space<vmem>>, vector<4x1xf32>,
      %cst_19 = arith.constant 0.000000e+00 : f32
      %28 = vector.broadcast %cst_19 : f32 to vector<4x1xf32>
      %c0_20 = arith.constant 0 : index
      %c0_21 = arith.constant 0 : index
      %29 = vector.load %arg8[%c0_20, %c0_21] : memref<4x1xf32, #tpu.memory_space<vmem>>, vector<4x1xf32>
      tpu.vector_store %arg8[%c0_20, %c0_21], %28 {strides = array<i32>} : memref<4x1xf32, #tpu.memory_space<vmem>>, vector<4x1xf32>,
    } else {
    }
    %cst = arith.constant 0.000000e+00 : f32
    %3 = vector.broadcast %cst : f32 to vector<4x256xf32>
    %c0_i32_1 = arith.constant 0 : i32
    %c2_i32 = arith.constant 2 : i32
    %4 = arith.muli %c0_i32_1, %c2_i32 : i32
    %5 = tpu.assume_multiple %4, 2 : i32
    %6 = arith.index_cast %5 : i32 to index
    %c0 = arith.constant 0 : index
    %c0_2 = arith.constant 0 : index
    %7 = vector.load %arg2[%6, %c0, %c0_2] : memref<2x4x256xf32, #tpu.memory_space<vmem>>, vector<2x4x256xf32>
    %cst_3 = arith.constant dense<0.000000e+00> : vector<4x256xf32>
    %8 = vector.multi_reduction <add>, %7, %cst_3 [0] : vector<2x4x256xf32> to vector<4x256xf32>
    %9 = arith.addf %3, %8 : vector<4x256xf32>
    %10 = arith.mulf %7, %7 : vector<2x4x256xf32>
    %cst_4 = arith.constant dense<0.000000e+00> : vector<4x256xf32>
    %11 = vector.multi_reduction <add>, %10, %cst_4 [0] : vector<2x4x256xf32> to vector<4x256xf32>
    %12 = arith.addf %3, %11 : vector<4x256xf32>
    %c1_i32 = arith.constant 1 : i32
    %cst_5 = arith.constant dense<0.000000e+00> : vector<4xf32>
    %13 = vector.multi_reduction <add>, %9, %cst_5 [1] : vector<4x256xf32> to vector<4xf32>
    %14 = vector.shape_cast %13 : vector<4xf32> to vector<4x1xf32>
    %cst_6 = arith.constant dense<0.000000e+00> : vector<4xf32>
    %15 = vector.multi_reduction <add>, %12, %cst_6 [1] : vector<4x256xf32> to vector<4xf32>
    %16 = vector.shape_cast %15 : vector<4xf32> to vector<4x1xf32>
    %c0_7 = arith.constant 0 : index
    %c0_8 = arith.constant 0 : index
    %17 = vector.load %arg7[%c0_7, %c0_8] : memref<4x1xf32, #tpu.memory_space<vmem>>, vector<4x1xf32>
    %18 = arith.addf %17, %14 : vector<4x1xf32>
    %c0_9 = arith.constant 0 : index
    %c0_10 = arith.constant 0 : index
    %19 = vector.load %arg7[%c0_9, %c0_10] : memref<4x1xf32, #tpu.memory_space<vmem>>, vector<4x1xf32>
    tpu.vector_store %arg7[%c0_9, %c0_10], %18 {strides = array<i32>} : memref<4x1xf32, #tpu.memory_space<vmem>>, vector<4x1xf32>,
    %c0_11 = arith.constant 0 : index
    %c0_12 = arith.constant 0 : index
    %20 = vector.load %arg8[%c0_11, %c0_12] : memref<4x1xf32, #tpu.memory_space<vmem>>, vector<4x1xf32>
    %21 = arith.addf %20, %16 : vector<4x1xf32>
    %c0_13 = arith.constant 0 : index
    %c0_14 = arith.constant 0 : index
    %22 = vector.load %arg8[%c0_13, %c0_14] : memref<4x1xf32, #tpu.memory_space<vmem>>, vector<4x1xf32>
    tpu.vector_store %arg8[%c0_13, %c0_14], %21 {strides = array<i32>} : memref<4x1xf32, #tpu.memory_space<vmem>>, vector<4x1xf32>,
    %c3_i32 = arith.constant 3 : i32
    %23 = arith.cmpi eq, %arg1, %c3_i32 : i32
    %24 = arith.extui %23 : i1 to i32
    %c0_i32_15 = arith.constant 0 : i32
    %25 = arith.cmpi ne, %24, %c0_i32_15 : i32
    scf.if %25 {
      %c0_16 = arith.constant 0 : index
      %c0_17 = arith.constant 0 : index
      %26 = vector.load %arg7[%c0_16, %c0_17] : memref<4x1xf32, #tpu.memory_space<vmem>>, vector<4x1xf32>
      %cst_18 = arith.constant 4.8828125E-4 : f32
      %27 = vector.broadcast %cst_18 : f32 to vector<4x1xf32>
      %28 = arith.mulf %26, %27 : vector<4x1xf32>
      %c0_19 = arith.constant 0 : index
      %c0_20 = arith.constant 0 : index
      %29 = vector.load %arg8[%c0_19, %c0_20] : memref<4x1xf32, #tpu.memory_space<vmem>>, vector<4x1xf32>
      %cst_21 = arith.constant 4.8828125E-4 : f32
      %30 = vector.broadcast %cst_21 : f32 to vector<4x1xf32>
      %31 = arith.mulf %29, %30 : vector<4x1xf32>
      %32 = arith.mulf %28, %28 : vector<4x1xf32>
      %33 = arith.subf %31, %32 : vector<4x1xf32>
      %cst_22 = arith.constant 0.000000e+00 : f32
      %34 = vector.broadcast %cst_22 : f32 to vector<4x1xf32>
      %35 = arith.maximumf %33, %34 : vector<4x1xf32>
      %cst_23 = arith.constant 9.99999974E-6 : f32
      %36 = vector.broadcast %cst_23 : f32 to vector<4x1xf32>
      %37 = arith.addf %35, %36 : vector<4x1xf32>
      %38 = math.rsqrt %37 : vector<4x1xf32>
      %c0_24 = arith.constant 0 : index
      %c0_25 = arith.constant 0 : index
      %39 = vector.load %arg3[%c0_24, %c0_25] : memref<4x1xf32, #tpu.memory_space<vmem>>, vector<4x1xf32>
      %40 = arith.mulf %38, %39 : vector<4x1xf32>
      %c0_26 = arith.constant 0 : index
      %c0_27 = arith.constant 0 : index
      %41 = vector.load %arg5[%c0_26, %c0_27] : memref<4x1xf32, #tpu.memory_space<vmem>>, vector<4x1xf32>
      tpu.vector_store %arg5[%c0_26, %c0_27], %40 {strides = array<i32>} : memref<4x1xf32, #tpu.memory_space<vmem>>, vector<4x1xf32>,
      %c0_28 = arith.constant 0 : index
      %c0_29 = arith.constant 0 : index
      %42 = vector.load %arg4[%c0_28, %c0_29] : memref<4x1xf32, #tpu.memory_space<vmem>>, vector<4x1xf32>
      %43 = arith.mulf %28, %40 : vector<4x1xf32>
      %44 = arith.subf %42, %43 : vector<4x1xf32>
      %c0_30 = arith.constant 0 : index
      %c0_31 = arith.constant 0 : index
      %45 = vector.load %arg6[%c0_30, %c0_31] : memref<4x1xf32, #tpu.memory_space<vmem>>, vector<4x1xf32>
      tpu.vector_store %arg6[%c0_30, %c0_31], %44 {strides = array<i32>} : memref<4x1xf32, #tpu.memory_space<vmem>>, vector<4x1xf32>,
    } else {
    }
    return
  }
  func.func @transform_0(%arg0: i32, %arg1: i32) -> (i32, i32, i32) {
    %c0_i32 = arith.constant 0 : i32
    %c0_i32_0 = arith.constant 0 : i32
    return %arg1, %arg0, %c0_i32 : i32, i32, i32
  }
  func.func @transform_1(%arg0: i32, %arg1: i32) -> (i32, i32) {
    %c0_i32 = arith.constant 0 : i32
    %c0_i32_0 = arith.constant 0 : i32
    return %arg0, %c0_i32 : i32, i32
  }
  func.func @transform_2(%arg0: i32, %arg1: i32) -> (i32, i32) {
    %c0_i32 = arith.constant 0 : i32
    %c0_i32_0 = arith.constant 0 : i32
    return %arg0, %c0_i32 : i32, i32
  }
  func.func @transform_3(%arg0: i32, %arg1: i32) -> (i32, i32) {
    %c0_i32 = arith.constant 0 : i32
    %c0_i32_0 = arith.constant 0 : i32
    return %arg0, %c0_i32 : i32, i32
  }
  func.func @transform_4(%arg0: i32, %arg1: i32) -> (i32, i32) {
    %c0_i32 = arith.constant 0 : i32
    %c0_i32_0 = arith.constant 0 : i32
    return %arg0, %c0_i32 : i32, i32
  }
}

</mosaic_0001>

<llo_original>
// kernel: tpu_custom_call.1
$region0: #{tpu_custom_call.1}
  #allocation0 [shape = 'u32[]', space=smem, size = 0x4, offset = 0x4, fixed_abs, tag = 'smem constant byte address 0x4 - core index']
  #allocation1 [shape = 'u32[72,128]{1,0:T(1,128)}', space=vmem, size = 0x9000, scoped, tag = 'internal scratch']
  #allocation2 [shape = 'f32[4,1]{1,0:T(4,128)}', space=vmem, size = 0x800, scoped, tag = 'scratch operand']
  #allocation3 [shape = 'f32[4,1]{1,0:T(4,128)}', space=vmem, size = 0x800, scoped, tag = 'scratch operand']
  %s0 = inlined_call_operand.hbm [shape: f32[8,4,256], index: 0, kind: input, shape index: {}]
  %s1 = inlined_call_operand.vmem [shape: f32[4,1], index: 1, kind: input, shape index: {}]
  %s2 = inlined_call_operand.vmem [shape: f32[4,1], index: 2, kind: input, shape index: {}]
  %s3 = inlined_call_operand.vmem [shape: f32[4,1], index: 3, kind: output, shape index: {0}]
  %s4 = inlined_call_operand.vmem [shape: f32[4,1], index: 4, kind: output, shape index: {1}]
  %5 = xla_tuple %s3, %s4
  %s6 = sld [smem:[#allocation0]]
  $region65: #{tpu_custom_call.1} parent=0
    _
  %s8 = ssub.s32 1, %s6
  %s9 = scalar_select 0, %s8, %s6
  $region1: #{tpu_custom_call.1} parent=0
    #allocation4 [shape = 'u8[16384]{0}', space=vmem, size = 0x4000, scoped, tag = 'input window, operand 0']
    #allocation5 [shape = 's32[2]{0}', space=sflag, size = 0x8, scoped, tag = 'scoped memory for tpu_custom_call.1']
    %10 = vsyncpa [#allocation5], 0
    %s11 = scalar_lea.sflag [#allocation5], 1
    %12 = vsyncpa %s11, 0
    loop: start=0, step=1, limit=6
    $region2: #{tpu_custom_call.1} parent=1 // loop_pre_header
      _
    $region3: #{tpu_custom_call.1} parent=1 // loop_header
      %s14 = sphi 0, %s18
      %p15 = scmp.ge.s32.totalorder %s14, 6
      %s21 = sphi 0, %s33
      %s22 = sphi 0, %s29
      %s23 = sphi 0, %s21
      %s24 = sphi 0, %s22
      %s25 = sphi 0, %s23
      %s26 = sphi 0, %s24
      %s38 = sphi 0, %s40
      %s41 = sphi 0, %s38
      %s42 = sphi 0, %s41
      %s58 = sphi 0, %s42
      %s64 = sphi 0, %s66
      %s67 = sphi 0, %s64
      %s68 = sphi 0, %s67
      %s84 = sphi 0, %s68
      %s90 = sphi 0, %s92
      %s93 = sphi 0, %s90
      %s94 = sphi 0, %s93
      %s110 = sphi 0, %s94
      %s116 = sphi 0, %s118
      %s119 = sphi 0, %s116
      %s120 = sphi 0, %s119
      %s136 = sphi 0, %s120
      %s142 = sphi 0, %s144
      %s145 = sphi 0, %s142
      %s146 = sphi 0, %s145
      %s162 = sphi 0, %s146
    $region4: #{tpu_custom_call.1} parent=1 // loop_header_branch
      %17 = sbr.rel (%p15) target = $region8
    $region5: #{tpu_custom_call.1} parent=1 // loop_body
      %s19 = ssub.s32 %s14, 1
      %s20 = ssub.s32 %s14, 2
      %s27 = sadd.s32 1, %s22
      %p28 = scmp.ge.s32.totalorder %s27, 4
      %s29 = scalar_select %p28, 0, %s27
      %s30 = sadd.s32 1, %s21
      %s31 = scalar_select %p28, %s30, %s21
      %p32 = scmp.ge.s32.totalorder %s31, 1
      %s33 = scalar_select %p32, 0, %s31
      %s34 = ssub.s32 %s22, %s29
      %s35 = ssub.s32 %s21, %s33
      %s36 = sor.u32 %s34, %s35
      %p37 = scmp.eq.s32.totalorder %s36, 0
      %s39 = sadd.s32 %s38, 1
      %s40 = scalar_select %p37, %s38, %s39
      %p43 = pneg %p37
      %p44 = scmp.eq.s32.totalorder %s14, 3
      %p45 = por %p43, %p44
      %p46 = scmp.ne.s32.totalorder %s38, %s41
      %p47 = scmp.eq.s32.totalorder %s14, 0
      %p48 = por %p46, %p47
      %p49 = scmp.ne.s32.totalorder %s38, %s41
      %p50 = scmp.eq.s32.totalorder %s19, 3
      %p51 = por %p49, %p50
      %p52 = scmp.ne.s32.totalorder %s41, %s42
      %p53 = scmp.eq.s32.totalorder %s19, 0
      %p54 = por %p52, %p53
      %p55 = scmp.ne.s32.totalorder %s41, %s42
      %p56 = scmp.eq.s32.totalorder %s20, 3
      %p57 = por %p55, %p56
      %p59 = scmp.ne.s32.totalorder %s42, %s58
      %p60 = scmp.eq.s32.totalorder %s20, 0
      %p61 = por %p59, %p60
      %s62 = ssub.s32 %s21, %s33
      %p63 = scmp.eq.s32.totalorder %s62, 0
      %s65 = sadd.s32 %s64, 1
      %s66 = scalar_select %p63, %s64, %s65
      %p69 = pneg %p63
      %p70 = scmp.eq.s32.totalorder %s14, 3
      %p71 = por %p69, %p70
      %p72 = scmp.ne.s32.totalorder %s64, %s67
      %p73 = scmp.eq.s32.totalorder %s14, 0
      %p74 = por %p72, %p73
      %p75 = scmp.ne.s32.totalorder %s64, %s67
      %p76 = scmp.eq.s32.totalorder %s19, 3
      %p77 = por %p75, %p76
      %p78 = scmp.ne.s32.totalorder %s67, %s68
      %p79 = scmp.eq.s32.totalorder %s19, 0
      %p80 = por %p78, %p79
      %p81 = scmp.ne.s32.totalorder %s67, %s68
      %p82 = scmp.eq.s32.totalorder %s20, 3
      %p83 = por %p81, %p82
      %p85 = scmp.ne.s32.totalorder %s68, %s84
      %p86 = scmp.eq.s32.totalorder %s20, 0
      %p87 = por %p85, %p86
      %s88 = ssub.s32 %s21, %s33
      %p89 = scmp.eq.s32.totalorder %s88, 0
      %s91 = sadd.s32 %s90, 1
      %s92 = scalar_select %p89, %s90, %s91
      %p95 = pneg %p89
      %p96 = scmp.eq.s32.totalorder %s14, 3
      %p97 = por %p95, %p96
      %p98 = scmp.ne.s32.totalorder %s90, %s93
      %p99 = scmp.eq.s32.totalorder %s14, 0
      %p100 = por %p98, %p99
      %p101 = scmp.ne.s32.totalorder %s90, %s93
      %p102 = scmp.eq.s32.totalorder %s19, 3
      %p103 = por %p101, %p102
      %p104 = scmp.ne.s32.totalorder %s93, %s94
      %p105 = scmp.eq.s32.totalorder %s19, 0
      %p106 = por %p104, %p105
      %p107 = scmp.ne.s32.totalorder %s93, %s94
      %p108 = scmp.eq.s32.totalorder %s20, 3
      %p109 = por %p107, %p108
      %p111 = scmp.ne.s32.totalorder %s94, %s110
      %p112 = scmp.eq.s32.totalorder %s20, 0
      %p113 = por %p111, %p112
      %s114 = ssub.s32 %s21, %s33
      %p115 = scmp.eq.s32.totalorder %s114, 0
      %s117 = sadd.s32 %s116, 1
      %s118 = scalar_select %p115, %s116, %s117
      %p121 = pneg %p115
      %p122 = scmp.eq.s32.totalorder %s14, 3
      %p123 = por %p121, %p122
      %p124 = scmp.ne.s32.totalorder %s116, %s119
      %p125 = scmp.eq.s32.totalorder %s14, 0
      %p126 = por %p124, %p125
      %p127 = scmp.ne.s32.totalorder %s116, %s119
      %p128 = scmp.eq.s32.totalorder %s19, 3
      %p129 = por %p127, %p128
      %p130 = scmp.ne.s32.totalorder %s119, %s120
      %p131 = scmp.eq.s32.totalorder %s19, 0
      %p132 = por %p130, %p131
      %p133 = scmp.ne.s32.totalorder %s119, %s120
      %p134 = scmp.eq.s32.totalorder %s20, 3
      %p135 = por %p133, %p134
      %p137 = scmp.ne.s32.totalorder %s120, %s136
      %p138 = scmp.eq.s32.totalorder %s20, 0
      %p139 = por %p137, %p138
      %s140 = ssub.s32 %s21, %s33
      %p141 = scmp.eq.s32.totalorder %s140, 0
      %s143 = sadd.s32 %s142, 1
      %s144 = scalar_select %p141, %s142, %s143
      %p147 = pneg %p141
      %p148 = scmp.eq.s32.totalorder %s14, 3
      %p149 = por %p147, %p148
      %p150 = scmp.ne.s32.totalorder %s142, %s145
      %p151 = scmp.eq.s32.totalorder %s14, 0
      %p152 = por %p150, %p151
      %p153 = scmp.ne.s32.totalorder %s142, %s145
      %p154 = scmp.eq.s32.totalorder %s19, 3
      %p155 = por %p153, %p154
      %p156 = scmp.ne.s32.totalorder %s145, %s146
      %p157 = scmp.eq.s32.totalorder %s19, 0
      %p158 = por %p156, %p157
      %p159 = scmp.ne.s32.totalorder %s145, %s146
      %p160 = scmp.eq.s32.totalorder %s20, 3
      %p161 = por %p159, %p160
      %p163 = scmp.ne.s32.totalorder %s146, %s162
      %p164 = scmp.eq.s32.totalorder %s20, 0
      %p165 = por %p163, %p164
      %p166 = scmp.le.s32.totalorder 1, %s14
      %p167 = scmp.lt.s32.totalorder %s14, 5
      %p168 = pnand %p166, %p167
      %p169 = pneg %p168
      // Predicated region
      $region9: #{tpu_custom_call.1} parent=5 // pred_check
        _
      $region10: #{tpu_custom_call.1} parent=5 // pred_check_branch
        %171 = sbr.rel (%p168) target = $region12
      $region11: #{tpu_custom_call.1} parent=5 // pred_region
        %s172 = ssub.s32 %s14, 1
        // Predicated region
        $region13: #{tpu_custom_call.1} parent=11 // pred_check
          %p173 = pneg %p80
        $region14: #{tpu_custom_call.1} parent=11 // pred_check_branch
          %175 = sbr.rel (%p173) target = $region16
        $region15: #{tpu_custom_call.1} parent=11 // pred_region
          %p176 = scmp.lt.s32.totalorder %s23, 0
          %s177 = scalar_select %p176, %s23, 0
          %s178 = smul.addr %s177, 4
          %s179 = scalar_lea.vmem %s1, %s178
        $region16: #{tpu_custom_call.1} parent=11 // pred_fallthru
          _
        // Predicated region
        $region17: #{tpu_custom_call.1} parent=11 // pred_check
          %p180 = pneg %p106
        $region18: #{tpu_custom_call.1} parent=11 // pred_check_branch
          %182 = sbr.rel (%p180) target = $region20
        $region19: #{tpu_custom_call.1} parent=11 // pred_region
          %p183 = scmp.lt.s32.totalorder %s23, 0
          %s184 = scalar_select %p183, %s23, 0
          %s185 = smul.addr %s184, 4
          %s186 = scalar_lea.vmem %s2, %s185
        $region20: #{tpu_custom_call.1} parent=11 // pred_fallthru
          _
      $region12: #{tpu_custom_call.1} parent=5 // pred_fallthru
        _
      %p187 = scmp.lt.s32.totalorder %s14, 4
      // Predicated region
      $region21: #{tpu_custom_call.1} parent=5 // pred_check
        %p188 = pneg %p187
      $region22: #{tpu_custom_call.1} parent=5 // pred_check_branch
        %190 = sbr.rel (%p188) target = $region24
      $region23: #{tpu_custom_call.1} parent=5 // pred_region
        // Predicated region
        $region25: #{tpu_custom_call.1} parent=23 // pred_check
          %p191 = pneg %p48
        $region26: #{tpu_custom_call.1} parent=23 // pred_check_branch
          %193 = sbr.rel (%p191) target = $region28
        $region27: #{tpu_custom_call.1} parent=23 // pred_region
          %s194 = sand.u32 %s38, 1
          %s195 = scalar_lea.sflag [#allocation5], %s194
          %s196 = sand.u32 %s38, 1
          %s197 = smul.addr %s196, 16
          %s198 = scalar_lea.vmem [#allocation4], %s197
          %s199 = smul.u32 2, %s22
          %201 = vsyncadd %s195, 0
          %s202 = smul.addr %s21, 2
          %s203 = smul.addr %s199, 2
          %s204 = sadd.s32 %s202, %s203
          %s205 = smul.addr %s204, 4
          %s206 = scalar_lea.hbm %s0, %s205
          %s207 = sshll.u32 %s206, 4
          %s208 = int_to_ptr.hbm [resolvable:$true] %s207
          %s209 = sshll.u32 %s198, 4
          %s210 = int_to_ptr.vmem [resolvable:$true] %s209
          %215 = dma.hbm_to_vmem [thread:$0]  %s208, 256, %s210, %s195, 128, 128, 8
        $region28: #{tpu_custom_call.1} parent=23 // pred_fallthru
          _
      $region24: #{tpu_custom_call.1} parent=5 // pred_fallthru
        _
      %p216 = scmp.le.s32.totalorder 1, %s14
      %p217 = scmp.lt.s32.totalorder %s14, 5
      %p218 = pnand %p216, %p217
      %p219 = pneg %p218
      // Predicated region
      $region29: #{tpu_custom_call.1} parent=5 // pred_check
        _
      $region30: #{tpu_custom_call.1} parent=5 // pred_check_branch
        %221 = sbr.rel (%p218) target = $region32
      $region31: #{tpu_custom_call.1} parent=5 // pred_region
        %s222 = ssub.s32 %s14, 1
        %s223 = sand.u32 %s41, 1
        %s224 = scalar_lea.sflag [#allocation5], %s223
        %s225 = sand.u32 %s41, 1
        %s226 = smul.addr %s225, 16
        %s227 = scalar_lea.vmem [#allocation4], %s226
        // Predicated region
        $region33: #{tpu_custom_call.1} parent=31 // pred_check
          %p228 = pneg %p54
        $region34: #{tpu_custom_call.1} parent=31 // pred_check_branch
          %230 = sbr.rel (%p228) target = $region36
        $region35: #{tpu_custom_call.1} parent=31 // pred_region
          %232 = dma.done %s224, 256
        $region36: #{tpu_custom_call.1} parent=31 // pred_fallthru
          _
        %s233 = sand.u32 %s41, 1
        %s234 = scalar_lea.sflag [#allocation5], %s233
        %s235 = sand.u32 %s41, 1
        %s236 = smul.addr %s235, 16
        %s237 = scalar_lea.vmem [#allocation4], %s236
        %p238 = pneg %p54
        %p239 = pneg %p51
        %p240 = scmp.lt.s32.totalorder %s23, 0
        %s241 = scalar_select %p240, %s23, 0
        %s242 = smul.addr %s241, 4
        %s243 = scalar_lea.vmem %s1, %s242
        %p244 = pneg %p80
        %p245 = pneg %p77
        %p246 = scmp.lt.s32.totalorder %s23, 0
        %s247 = scalar_select %p246, %s23, 0
        %s248 = smul.addr %s247, 4
        %s249 = scalar_lea.vmem %s2, %s248
        %p250 = pneg %p106
        %p251 = pneg %p103
        %p252 = pneg %p132
        %p253 = pneg %p129
        %p254 = scmp.lt.s32.totalorder %s23, 0
        %s255 = scalar_select %p254, %s23, 0
        %s256 = smul.addr %s255, 4
        %s257 = scalar_lea.vmem %s3, %s256
        %p258 = pneg %p158
        %p259 = pneg %p155
        %p260 = scmp.lt.s32.totalorder %s23, 0
        %s261 = scalar_select %p260, %s23, 0
        %s262 = smul.addr %s261, 4
        %s263 = scalar_lea.vmem %s4, %s262
        %s264 = smul.u32 2, %s24
        %p265 = scmp.lt.s32.totalorder %s23, 0
        %s266 = scalar_select %p265, %s23, 0
        %s267 = smul.addr %s266, 4
        %s268 = scalar_lea.vmem %s1, %s267
        %p269 = scmp.lt.s32.totalorder %s23, 0
        %s270 = scalar_select %p269, %s23, 0
        %s271 = smul.addr %s270, 4
        %s272 = scalar_lea.vmem %s2, %s271
        %p273 = scmp.lt.s32.totalorder %s23, 0
        %s274 = scalar_select %p273, %s23, 0
        %s275 = smul.addr %s274, 4
        %s276 = scalar_lea.vmem %s3, %s275
        %p277 = scmp.lt.s32.totalorder %s23, 0
        %s278 = scalar_select %p277, %s23, 0
        %s279 = smul.addr %s278, 4
        %s280 = scalar_lea.vmem %s4, %s279
        %p281 = scmp.eq.s32.totalorder %s24, 0
        // Predicated region
        $region37: #{tpu_custom_call.1} parent=31 // pred_check
          %p282 = pneg %p281
        $region38: #{tpu_custom_call.1} parent=31 // pred_check_branch
          %284 = sbr.rel (%p282) target = $region40
        $region39: #{tpu_custom_call.1} parent=31 // pred_region
          %vm285 = vcmask 3072
          %286 = vst.msk [vmem:[#allocation2] sm:$0xf] %vm285, 0.0
          %287 = vst.msk [vmem:[#allocation3] sm:$0xf] %vm285, 0.0
        $region40: #{tpu_custom_call.1} parent=31 // pred_fallthru
          _
        %s288 = smul.u32 0, 2
        %s289 = smul.addr %s288, 4
        %s290 = scalar_lea.vmem %s227, %s289 [#allocation4]
        %v291 = vld [vmem:[%s290] sm:$0xff]
        %v292 = vld [vmem:[%s290 + $0x8] sm:$0xff]
        %295 = vst [vmem:[#allocation1] ss:$2 sm:$0xff] %v291
        %v296 = vld.sshfl [vmem:[#allocation1] sm:$0xff pattern:$0x75316420]
        %v297 = vld.sshfl [vmem:[#allocation1 + $0x8] sm:$0xff pattern:$0x75316420]
        %s298 = scalar_lea.vmem [#allocation1], 16
        %299 = vst [vmem:[%s298] ss:$2 sm:$0xff] %v292
        %v300 = vld.sshfl [vmem:[#allocation1 + $0x10] sm:$0xff pattern:$0x75316420]
        %v301 = vld.sshfl [vmem:[#allocation1 + $0x18] sm:$0xff pattern:$0x75316420]
        %vm306 = vcmask 1043456
        %v307 = vsel %vm306, %v296, 0.0
        %v308 = vsel %vm306, %v300, 0.0
        %v309 = vadd.f32 %v307, %v308
        %v310 = vsel %vm306, %v297, 0.0
        %v311 = vsel %vm306, %v301, 0.0
        %v312 = vadd.f32 %v310, %v311
        %v313 = vadd.f32 %v309, 0.0
        %v314 = vadd.f32 %v312, 0.0
        %v315 = vmul.f32 %v291, %v291
        %v316 = vmul.f32 %v292, %v292
        %319 = vst [vmem:[#allocation1] ss:$2 sm:$0xff] %v315
        %v320 = vld.sshfl [vmem:[#allocation1] sm:$0xff pattern:$0x75316420]
        %v321 = vld.sshfl [vmem:[#allocation1 + $0x8] sm:$0xff pattern:$0x75316420]
        %s322 = scalar_lea.vmem [#allocation1], 16
        %323 = vst [vmem:[%s322] ss:$2 sm:$0xff] %v316
        %v324 = vld.sshfl [vmem:[#allocation1 + $0x10] sm:$0xff pattern:$0x75316420]
        %v325 = vld.sshfl [vmem:[#allocation1 + $0x18] sm:$0xff pattern:$0x75316420]
        %v330 = vsel %vm306, %v320, 0.0
        %v331 = vsel %vm306, %v324, 0.0
        %v332 = vadd.f32 %v330, %v331
        %v333 = vsel %vm306, %v321, 0.0
        %v334 = vsel %vm306, %v325, 0.0
        %v335 = vadd.f32 %v333, %v334
        %v336 = vadd.f32 %v332, 0.0
        %v337 = vadd.f32 %v335, 0.0
        %v338 = vsel %vm306, %v313, 0.0
        %v339 = vsel %vm306, %v314, 0.0
        %v340 = vadd.f32 %v338, %v339
        %341 = vadd.xlane.f32.xlu0 %v340
        %v342 = vpop.xlane.xlu0 %341
        %v343 = vsel %vm306, %v336, 0.0
        %v344 = vsel %vm306, %v337, 0.0
        %v345 = vadd.f32 %v343, %v344
        %346 = vadd.xlane.f32.xlu0 %v345
        %v347 = vpop.xlane.xlu0 %346
        %v348 = vld [vmem:[#allocation2] sm:$0xf]
        %v349 = vadd.f32 %v348, %v342
        %vm350 = vcmask 3072
        %351 = vst.msk [vmem:[#allocation2] sm:$0xf] %vm350, %v349
        %v352 = vld [vmem:[#allocation3] sm:$0xf]
        %v353 = vadd.f32 %v352, %v347
        %354 = vst.msk [vmem:[#allocation3] sm:$0xf] %vm350, %v353
        %p355 = scmp.eq.s32.totalorder %s24, 3
        // Predicated region
        $region41: #{tpu_custom_call.1} parent=31 // pred_check
          %p356 = pneg %p355
        $region42: #{tpu_custom_call.1} parent=31 // pred_check_branch
          %358 = sbr.rel (%p356) target = $region44
        $region43: #{tpu_custom_call.1} parent=31 // pred_region
          %v359 = vld [vmem:[#allocation2] sm:$0xf]
          %v360 = vmul.f32 %v359, 0.00048828125
          %v361 = vld [vmem:[#allocation3] sm:$0xf]
          %v362 = vmul.f32 %v361, 0.00048828125
          %v363 = vmul.f32 %v360, %v360
          %v364 = vsub.f32 %v362, %v363
          %v365 = vmax.f32 %v364, 0.0
          %v366 = vadd.f32 %v365, 1e-05
          %v367 = vrsqrt.pop %v366
          %v368 = vmul.f32 %v367, %v366
          %v369 = vmul.f32 %v368, %v367
          %v370 = vmul.f32 0.5, %v369
          %v371 = vsub.f32 1.5, %v370
          %v372 = vmul.f32 %v367, %v371
          %vm373 = vweird.f32 %v366
          %vm374 = vweird.f32 %v367
          %vm375 = vmor %vm373, %vm374
          %v376 = vsel %vm375, %v367, %v372
          %v377 = vld [vmem:[%s268] sm:$0xf]
          %v378 = vmul.f32 %v376, %v377
          %379 = vst.msk [vmem:[%s276] sm:$0xf] %vm350, %v378
          %v380 = vld [vmem:[%s272] sm:$0xf]
          %v381 = vmul.f32 %v360, %v378
          %v382 = vsub.f32 %v380, %v381
          %383 = vst.msk [vmem:[%s280] sm:$0xf] %vm350, %v382
        $region44: #{tpu_custom_call.1} parent=31 // pred_fallthru
          _
        %p384 = scmp.lt.s32.totalorder %s23, 0
        %s385 = scalar_select %p384, %s23, 0
        %s386 = smul.addr %s385, 4
        %s387 = scalar_lea.vmem %s3, %s386
        %p388 = scmp.lt.s32.totalorder %s23, 0
        %s389 = scalar_select %p388, %s23, 0
        %s390 = smul.addr %s389, 4
        %s391 = scalar_lea.vmem %s4, %s390
        // Predicated region
        $region45: #{tpu_custom_call.1} parent=31 // pred_check
          %p392 = pneg %p129
        $region46: #{tpu_custom_call.1} parent=31 // pred_check_branch
          %394 = sbr.rel (%p392) target = $region48
        $region47: #{tpu_custom_call.1} parent=31 // pred_region
          _
        $region48: #{tpu_custom_call.1} parent=31 // pred_fallthru
          _
        // Predicated region
        $region49: #{tpu_custom_call.1} parent=31 // pred_check
          %p395 = pneg %p155
        $region50: #{tpu_custom_call.1} parent=31 // pred_check_branch
          %397 = sbr.rel (%p395) target = $region52
        $region51: #{tpu_custom_call.1} parent=31 // pred_region
          _
        $region52: #{tpu_custom_call.1} parent=31 // pred_fallthru
          _
        // Predicated region
        $region53: #{tpu_custom_call.1} parent=31 // pred_check
          %p398 = pneg %p129
        $region54: #{tpu_custom_call.1} parent=31 // pred_check_branch
          %400 = sbr.rel (%p398) target = $region56
        $region55: #{tpu_custom_call.1} parent=31 // pred_region
          %p401 = scmp.lt.s32.totalorder %s23, 0
          %s402 = scalar_select %p401, %s23, 0
          %s403 = smul.addr %s402, 4
          %s404 = scalar_lea.vmem %s3, %s403
        $region56: #{tpu_custom_call.1} parent=31 // pred_fallthru
          _
        // Predicated region
        $region57: #{tpu_custom_call.1} parent=31 // pred_check
          %p405 = pneg %p155
        $region58: #{tpu_custom_call.1} parent=31 // pred_check_branch
          %407 = sbr.rel (%p405) target = $region60
        $region59: #{tpu_custom_call.1} parent=31 // pred_region
          %p408 = scmp.lt.s32.totalorder %s23, 0
          %s409 = scalar_select %p408, %s23, 0
          %s410 = smul.addr %s409, 4
          %s411 = scalar_lea.vmem %s4, %s410
        $region60: #{tpu_custom_call.1} parent=31 // pred_fallthru
          _
      $region32: #{tpu_custom_call.1} parent=5 // pred_fallthru
        _
      %p412 = scmp.le.s32.totalorder 2, %s14
      // Predicated region
      $region61: #{tpu_custom_call.1} parent=5 // pred_check
        %p413 = pneg %p412
      $region62: #{tpu_custom_call.1} parent=5 // pred_check_branch
        %415 = sbr.rel (%p413) target = $region64
      $region63: #{tpu_custom_call.1} parent=5 // pred_region
        %s416 = ssub.s32 %s14, 2
      $region64: #{tpu_custom_call.1} parent=5 // pred_fallthru
        _
    $region6: #{tpu_custom_call.1} parent=1 // loop_footer
      %s18 = sadd.s32 1, %s14
    $region7: #{tpu_custom_call.1} parent=1 // loop_footer_branch
      %13 = sbr.rel target = $region3
    $region8: #{tpu_custom_call.1} parent=1 // loop_exit
      _
    %417 = vsyncpa [#allocation5], 1
    %s418 = scalar_lea.sflag [#allocation5], 1
    %419 = vsyncpa %s418, 1

</llo_original>
